<compile_context>
chip_gen: v5e
topology: v5e:2x2
jax: 0.10.0
libtpu: 0.0.40
codegen_flags: <defaults>
</compile_context>

<pallas_src>
import numpy as np

import jax
import jax.numpy as jnp
from jax import lax
from jax.experimental import pallas as pl
from jax.experimental.pallas import tpu as pltpu

_EPS = 1e-5

# ----------------------------------------------------------------------------
# Module configuration (mirrors the PyTorch __init__)
# ----------------------------------------------------------------------------
B = 2
C_IN, W_IN = 4, 16          # num_structured_input_channel, structured_input_width
U_IN = 8                    # unstructured_input_width
OUT_CH = [16, 32]
KERNEL = [3, 3]
STRIDE = [2, 2]
NUM_CHARS = 0
U_LAT = 10                  # unstructured_latent_width default for DENSE latent


def _conv_out_w(L, k, s, p):
    return (L + 2 * p - k) // s + 1


W0 = _conv_out_w(W_IN, KERNEL[0], STRIDE[0], KERNEL[0] // 2)     # 8
W1 = _conv_out_w(W0, KERNEL[1], STRIDE[1], KERNEL[1] // 2)       # 4
FLAT = OUT_CH[1] * W1                                            # 128
COMBINED = FLAT + U_LAT                                          # 138
LATENT_OUT = FLAT                                                # 128
STRUCT_COLS = C_IN * W_IN                                        # 64
OUT_COLS = 128                                                   # lane-dense slab width


def _get_paddings(w_out_target, w_in, s, k, d=1):
    E = s * (w_in - 1) + d * (k - 1) + 1
    if w_out_target - E < 0:
        pad = (E - w_out_target) / 2
        pad = int(pad + pad % 1)
        outpad = w_out_target - E + 2 * pad
    elif 0 <= w_out_target - E <= s - 1:
        outpad = w_out_target - E
        pad = 0
    else:
        pad = (E - w_out_target + s - 1) / 2
        pad = int(pad + pad % 1)
        outpad = s - 1
    return pad, outpad


DEC_PAD0, DEC_OUTPAD0 = _get_paddings(W0, W1, STRIDE[1], KERNEL[1])
W_DEC0 = (W1 - 1) * STRIDE[1] - 2 * DEC_PAD0 + KERNEL[1] + DEC_OUTPAD0
DEC_PAD1, DEC_OUTPAD1 = _get_paddings(W_IN, W_DEC0, STRIDE[0], KERNEL[0])
W_DEC1 = (W_DEC0 - 1) * STRIDE[0] - 2 * DEC_PAD1 + KERNEL[0] + DEC_OUTPAD1
assert W_DEC0 == W0 and W_DEC1 == W_IN

# ----------------------------------------------------------------------------
# Matrix-slab layout (row offsets, all multiples of 8 so every in-kernel slice
# stays (8,128)-tile aligned)
# ----------------------------------------------------------------------------
_OFF_T0,   _N_T0   = 0,    64     # conv0 Toeplitz (channel-major input rows)
_OFF_A0,   _N_A0   = 64,   128    # BN0 channel-average matrix
_OFF_T1,   _N_T1   = 192,  128    # conv1 Toeplitz
_OFF_A1,   _N_A1   = 320,  128    # BN1 channel-average matrix
_OFF_WUE1, _N_WUE1 = 448,  8      # unstructured encoder linear 1 (8 -> 128pad)
_OFF_WUE2, _N_WUE2 = 456,  128    # unstructured encoder linear 2 (128pad -> 128pad)
_OFF_WLAT, _N_WLAT = 584,  256    # fused latent dense over [h | u_pad]
_OFF_TD0,  _N_TD0  = 840,  128    # decoder tconv0 Toeplitz
_OFF_WUD1, _N_WUD1 = 968,  128    # unstructured decoder linear 1 (128 -> 128pad)
_OFF_WOUT, _N_WOUT = 1096, 256    # fused output weight over [d0 | ud_pad]
_M_ROWS = 1352
_V_ROWS = 16


# ----------------------------------------------------------------------------
# Parameters in PyTorch-like layouts (random init)
# ----------------------------------------------------------------------------
def init_params(key):
    keys = iter(jax.random.split(key, 40))

    def nrm(shape, scale=0.1):
        return scale * jax.random.normal(next(keys), shape, dtype=jnp.float32)

    p = {}
    # structured encoder (CnnEncoder)
    p['enc_conv0_w'] = nrm((OUT_CH[0], C_IN, KERNEL[0]))
    p['enc_conv0_b'] = nrm((OUT_CH[0],))
    p['enc_bn0_g'] = 1.0 + nrm((OUT_CH[0],))
    p['enc_bn0_b'] = nrm((OUT_CH[0],))
    p['enc_conv1_w'] = nrm((OUT_CH[1], OUT_CH[0], KERNEL[1]))
    p['enc_conv1_b'] = nrm((OUT_CH[1],))
    p['enc_bn1_g'] = 1.0 + nrm((OUT_CH[1],))
    p['enc_bn1_b'] = nrm((OUT_CH[1],))
    # unstructured encoder (DenseEncoder: 8 -> 10 -> 10)
    p['ue_l1_w'] = nrm((U_IN, 10))
    p['ue_l1_b'] = nrm((10,))
    p['ue_bn1_g'] = 1.0 + nrm((10,))
    p['ue_bn1_b'] = nrm((10,))
    p['ue_l2_w'] = nrm((10, U_LAT))
    p['ue_l2_b'] = nrm((U_LAT,))
    p['ue_bn2_g'] = 1.0 + nrm((U_LAT,))
    p['ue_bn2_b'] = nrm((U_LAT,))
    # latent layer (LatentDense: 138 -> 128), matmul layout (in, out)
    p['lat_w'] = nrm((COMBINED, LATENT_OUT))
    p['lat_b'] = nrm((LATENT_OUT,))
    # structured decoder (CnnDecoder), PyTorch ConvTranspose1d (Cin, Cout, K)
    p['dec_tconv0_w'] = nrm((OUT_CH[1], OUT_CH[0], KERNEL[1]))
    p['dec_tconv0_b'] = nrm((OUT_CH[0],))
    p['dec_out_w'] = nrm((OUT_CH[0], C_IN, KERNEL[0]))
    p['dec_out_b'] = nrm((C_IN,))
    # unstructured decoder (DenseDecoder: 128 -> 10 -> 8), matmul layout
    p['ud_l1_w'] = nrm((FLAT, 10))
    p['ud_l1_b'] = nrm((10,))
    p['ud_l2_w'] = nrm((10, U_IN))
    p['ud_l2_b'] = nrm((U_IN,))
    return p


# ----------------------------------------------------------------------------
# Init-time weight preprocessing (Toeplitz conv operators, expanded BN params,
# everything packed into two slabs).
# Structured activation layout inside the kernel:
#   input a0 / output slab:    channel-major columns (c*W + l)  -> free reshape
#   hidden conv activations:   position-major columns (l*C + c)
#   latent 'shared':           PyTorch channel-major (c*L1 + l)
# ----------------------------------------------------------------------------
def _conv1d_toeplitz(w, L_in, stride, pad, in_channel_major_rows=False):
    """Conv1d weight (Cout,Cin,K) -> dense (L_in*Cin, L_out*Cout) operator.
    Output columns are always position-major (lo*Cout + co)."""
    w = np.asarray(w, np.float32)
    Cout, Cin, K = w.shape
    L_out = (L_in + 2 * pad - K) // stride + 1
    T = np.zeros((L_in * Cin, L_out * Cout), np.float32)
    for lo in range(L_out):
        for k in range(K):
            li = lo * stride + k - pad
            if 0 <= li < L_in:
                for ci in range(Cin):
                    row = ci * L_in + li if in_channel_major_rows else li * Cin + ci
                    T[row, lo * Cout:(lo + 1) * Cout] = w[:, ci, k]
    return T


def _tconv1d_toeplitz(w, L_in, stride, pad, L_out, in_channel_major,
                      out_channel_major=False):
    """ConvTranspose1d weight (Cin,Cout,K) -> dense (L_in*Cin, L_out*Cout)."""
    w = np.asarray(w, np.float32)
    Cin, Cout, K = w.shape
    T = np.zeros((L_in * Cin, L_out * Cout), np.float32)
    for li in range(L_in):
        for k in range(K):
            lo = li * stride + k - pad
            if 0 <= lo < L_out:
                for ci in range(Cin):
                    row = ci * L_in + li if in_channel_major else li * Cin + ci
                    for co in range(Cout):
                        col = co * L_out + lo if out_channel_major else lo * Cout + co
                        T[row, col] += w[ci, co, k]
    return T


def _expand_chan_posmajor(v, L):
    """(C,) -> (1, L*C) with index l*C+c = v[c]  (position-major)."""
    v = np.asarray(v, np.float32).reshape(1, 1, -1)
    return np.tile(v, (1, L, 1)).reshape(1, -1)


def _chan_avg(L, C):
    """Position-major channel-averaging matrix: (rowvec @ A)[l*C+c] = mean_l rowvec[., c]."""
    return np.kron(np.ones((L, L), np.float32) / L, np.eye(C, dtype=np.float32))


def prepare_operands(p):
    L0, C0 = W0, OUT_CH[0]
    L1, C1 = W1, OUT_CH[1]

    def pad_cols(a, n=OUT_COLS):
        a = np.asarray(a, np.float32)
        out = np.zeros((a.shape[0], n), np.float32)
        out[:, :a.shape[1]] = a
        return out

    def pad_rowvec(v, n=OUT_COLS):
        v = np.asarray(v, np.float32).reshape(-1)
        out = np.zeros((1, n), np.float32)
        out[0, :v.shape[0]] = v
        return out

    # --- matrix slab pieces (all 128 lanes wide) ---
    T0 = _conv1d_toeplitz(p['enc_conv0_w'], W_IN, STRIDE[0], KERNEL[0] // 2,
                          in_channel_major_rows=True)                      # (64,128)
    A0 = _chan_avg(L0, C0)                                                 # (128,128)
    T1 = _conv1d_toeplitz(p['enc_conv1_w'], L0, STRIDE[1], KERNEL[1] // 2,
                          in_channel_major_rows=False)                     # (128,128)
    A1 = _chan_avg(L1, C1)                                                 # (128,128)
    WUE1 = pad_cols(p['ue_l1_w'])                                          # (8,128)
    WUE2 = np.zeros((OUT_COLS, OUT_COLS), np.float32)                      # (128,128)
    WUE2[:10, :U_LAT] = np.asarray(p['ue_l2_w'], np.float32)
    # fused latent dense over [h(pos-major) | u_pad]
    lat_w = np.asarray(p['lat_w'], np.float32)                             # (138,128)
    perm = np.array([c * L1 + l for l in range(L1) for c in range(C1)], np.int64)
    WLAT = np.zeros((2 * OUT_COLS, OUT_COLS), np.float32)                  # (256,128)
    WLAT[:FLAT, :] = lat_w[:FLAT, :][perm, :]
    WLAT[OUT_COLS:OUT_COLS + U_LAT, :] = lat_w[FLAT:, :]
    TD0 = _tconv1d_toeplitz(p['dec_tconv0_w'], L1, STRIDE[1], DEC_PAD0, W_DEC0,
                            in_channel_major=True, out_channel_major=False)  # (128,128)
    WUD1 = pad_cols(p['ud_l1_w'])                                          # (128,128)
    # fused output weight over [d0(pos-major) | ud_pad]; structured columns are
    # channel-major (c*W+l) so the wrapper output reshape is free (NCW).
    TD1 = _tconv1d_toeplitz(p['dec_out_w'], W_DEC0, STRIDE[0], DEC_PAD1, W_DEC1,
                            in_channel_major=False, out_channel_major=True)  # (128,64)
    WOUT = np.zeros((2 * OUT_COLS, OUT_COLS), np.float32)                  # (256,128)
    WOUT[:TD1.shape[0], :STRUCT_COLS] = TD1
    WOUT[OUT_COLS:OUT_COLS + 10, STRUCT_COLS:STRUCT_COLS + U_IN] = \
        np.asarray(p['ud_l2_w'], np.float32)

    pieces = [(T0, _OFF_T0), (A0, _OFF_A0), (T1, _OFF_T1), (A1, _OFF_A1),
              (WUE1, _OFF_WUE1), (WUE2, _OFF_WUE2), (WLAT, _OFF_WLAT),
              (TD0, _OFF_TD0), (WUD1, _OFF_WUD1), (WOUT, _OFF_WOUT)]
    m_slab = np.zeros((_M_ROWS, OUT_COLS), np.float32)
    cursor = 0
    for mat, off in pieces:
        assert mat.shape[1] == OUT_COLS and off == cursor, (off, cursor, mat.shape)
        m_slab[off:off + mat.shape[0], :] = mat
        cursor = off + mat.shape[0]
    assert cursor == _M_ROWS

    # --- row-vector slab ---
    rows = [
        _expand_chan_posmajor(p['enc_conv0_b'], L0),   # 0  conv0 bias
        _expand_chan_posmajor(p['enc_bn0_g'], L0),     # 1  bn0 gamma
        _expand_chan_posmajor(p['enc_bn0_b'], L0),     # 2  bn0 beta
        _expand_chan_posmajor(p['enc_conv1_b'], L1),   # 3  conv1 bias
        _expand_chan_posmajor(p['enc_bn1_g'], L1),     # 4  bn1 gamma
        _expand_chan_posmajor(p['enc_bn1_b'], L1),     # 5  bn1 beta
        pad_rowvec(p['ue_l1_b']),                      # 6
        pad_rowvec(p['ue_bn1_g']),                     # 7
        pad_rowvec(p['ue_bn1_b']),                     # 8
        pad_rowvec(p['ue_l2_b']),                      # 9
        pad_rowvec(p['ue_bn2_g']),                     # 10
        pad_rowvec(p['ue_bn2_b']),                     # 11
        np.asarray(p['lat_b'], np.float32).reshape(1, -1),   # 12 latent bias
        _expand_chan_posmajor(p['dec_tconv0_b'], W_DEC0),    # 13 tconv0 bias
        pad_rowvec(p['ud_l1_b']),                      # 14
    ]
    bout = np.zeros((1, OUT_COLS), np.float32)         # 15 combined output bias
    bout[0, :STRUCT_COLS] = np.repeat(np.asarray(p['dec_out_b'], np.float32), W_DEC1)
    bout[0, STRUCT_COLS:STRUCT_COLS + U_IN] = np.asarray(p['ud_l2_b'], np.float32)
    rows.append(bout)
    v_slab = np.concatenate(rows, axis=0)
    assert v_slab.shape == (_V_ROWS, OUT_COLS)

    return jnp.asarray(m_slab), jnp.asarray(v_slab)


# ----------------------------------------------------------------------------
# The single fused Pallas kernel (4 operands: 2 activations + 2 weight slabs)
# ----------------------------------------------------------------------------
def _fused_kernel(a0_ref, u_ref, m_ref, v_ref, out_ref):
    def mm(a, b):
        return jnp.dot(a, b, preferred_element_type=jnp.float32)

    def row(i):
        return v_ref[i:i + 1, :]

    def bn_struct(x, A, g, b, relu):
        # train-mode BatchNorm1d over (batch, width): stack colmean(x) and
        # colmean(x*x) and hit the channel-average matrix with ONE matmul.
        s1 = jnp.mean(x, axis=0, keepdims=True)
        s2 = jnp.mean(x * x, axis=0, keepdims=True)
        stats = mm(jnp.concatenate([s1, s2], axis=0), A)     # (2, 128)
        m = stats[0:1, :]
        var = stats[1:2, :] - m * m
        y = (x - m) * lax.rsqrt(var + _EPS) * g + b
        return jnp.maximum(y, 0.0) if relu else y

    def bn_vec(x, g, b, relu):
        # per-feature BatchNorm1d; padded (zero) lanes stay exactly zero
        m = jnp.mean(x, axis=0, keepdims=True)
        d = x - m
        var = jnp.mean(d * d, axis=0, keepdims=True)
        y = d * lax.rsqrt(var + _EPS) * g + b
        return jnp.maximum(y, 0.0) if relu else y

    # --- structured encoder (convs as Toeplitz matmuls, BN(+ReLU) fused) ---
    h = mm(a0_ref[...], m_ref[_OFF_T0:_OFF_T0 + _N_T0, :]) + row(0)          # (B,128)
    h = bn_struct(h, m_ref[_OFF_A0:_OFF_A0 + _N_A0, :], row(1), row(2), relu=True)
    h = mm(h, m_ref[_OFF_T1:_OFF_T1 + _N_T1, :]) + row(3)                    # (B,128)
    h = bn_struct(h, m_ref[_OFF_A1:_OFF_A1 + _N_A1, :], row(4), row(5), relu=False)

    # --- unstructured encoder (padded to 128 lanes end-to-end) ---
    u = mm(u_ref[...], m_ref[_OFF_WUE1:_OFF_WUE1 + _N_WUE1, :]) + row(6)     # (B,128)
    u = bn_vec(u, row(7), row(8), relu=True)
    u = mm(u, m_ref[_OFF_WUE2:_OFF_WUE2 + _N_WUE2, :]) + row(9)              # (B,128)
    u = bn_vec(u, row(10), row(11), relu=False)

    # --- latent dense: single 256-deep contraction over [h | u] ---
    hu = jnp.concatenate([h, u], axis=-1)                                    # (B,256)
    shared = mm(hu, m_ref[_OFF_WLAT:_OFF_WLAT + _N_WLAT, :]) + row(12)       # (B,128)

    # --- structured decoder tconv0 + unstructured decoder hidden ---
    d0 = jnp.maximum(mm(shared, m_ref[_OFF_TD0:_OFF_TD0 + _N_TD0, :]) + row(13), 0.0)
    ud = jnp.maximum(mm(shared, m_ref[_OFF_WUD1:_OFF_WUD1 + _N_WUD1, :]) + row(14), 0.0)

    # --- fused lane-dense output slab: [struct(64, channel-major) | unstr(8) | 0] ---
    dd = jnp.concatenate([d0, ud], axis=-1)                                  # (B,256)
    out_ref[...] = mm(dd, m_ref[_OFF_WOUT:_OFF_WOUT + _N_WOUT, :]) + row(15)


def make_fused_forward(params):
    m_slab, v_slab = prepare_operands(params)

    bytes_accessed = int(m_slab.size * 4 + v_slab.size * 4 +
                         B * (STRUCT_COLS + U_IN + OUT_COLS) * 4)
    flops = int(2 * B * (64 * 128 + 2 * 2 * 128 * 128 + 128 * 128 + 8 * 128 +
                         128 * 128 + 256 * 128 + 128 * 128 + 128 * 128 + 256 * 128))

    fused = pl.pallas_call(
        _fused_kernel,
        out_shape=jax.ShapeDtypeStruct((B, OUT_COLS), jnp.float32),
        in_specs=[pl.BlockSpec(memory_space=pltpu.MemorySpace.VMEM)] * 4,
        out_specs=pl.BlockSpec(memory_space=pltpu.MemorySpace.VMEM),
        cost_estimate=pl.CostEstimate(flops=flops, transcendentals=0,
                                      bytes_accessed=bytes_accessed),
    )

    def forward(struct_x, unstruct_x):
        # channel-major flatten of NCW input: a free reshape (permutation is
        # baked into the conv0 Toeplitz rows), no transpose launch.
        a0 = struct_x.reshape(struct_x.shape[0], C_IN * W_IN).astype(jnp.float32)
        out = fused(a0, unstruct_x.astype(jnp.float32), m_slab, v_slab)
        # structured output columns are channel-major, so this reshape is NCW directly.
        phy = out[:, :STRUCT_COLS].reshape(-1, C_IN, W_IN)
        unstr = out[:, STRUCT_COLS:STRUCT_COLS + U_IN]
        # num_chars == 0 -> char output None; latent != GAUSS -> shared None
        return phy, None, unstr, None

    return forward


# ----------------------------------------------------------------------------
# Pure-JAX reference (literal Conv1d / ConvTranspose1d / BN semantics)
# ----------------------------------------------------------------------------
def _ref_conv1d(x, w, b, stride, pad):
    Bn, Cin, L = x.shape
    Cout, _, K = w.shape
    Lout = (L + 2 * pad - K) // stride + 1
    xp = jnp.pad(x, ((0, 0), (0, 0), (pad, pad)))
    out = jnp.zeros((Bn, Cout, Lout), jnp.float32)
    for k in range(K):
        xs = xp[:, :, k::stride][:, :, :Lout]
        out = out + jnp.einsum('bcl,oc->bol', xs, w[:, :, k])
    return out + b[None, :, None]


def _ref_tconv1d(x, w, b, stride, pad, outpad):
    Bn, Cin, L = x.shape
    _, Cout, K = w.shape
    Lout = (L - 1) * stride - 2 * pad + K + outpad
    out = jnp.zeros((Bn, Cout, Lout), jnp.float32)
    for li in range(L):
        for k in range(K):
            lo = li * stride + k - pad
            if 0 <= lo < Lout:
                out = out.at[:, :, lo].add(jnp.einsum('bc,co->bo', x[:, :, li], w[:, :, k]))
    return out + b[None, :, None]


def _ref_bn_ncw(x, g, b):
    m = jnp.mean(x, axis=(0, 2), keepdims=True)
    v = jnp.mean((x - m) ** 2, axis=(0, 2), keepdims=True)
    return (x - m) * lax.rsqrt(v + _EPS) * g[None, :, None] + b[None, :, None]


def _ref_bn_2d(x, g, b):
    m = jnp.mean(x, axis=0, keepdims=True)
    v = jnp.mean((x - m) ** 2, axis=0, keepdims=True)
    return (x - m) * lax.rsqrt(v + _EPS) * g[None, :] + b[None, :]


def aecnn_reference(p, sx, ux):
    h = _ref_conv1d(sx, p['enc_conv0_w'], p['enc_conv0_b'], STRIDE[0], KERNEL[0] // 2)
    h = jnp.maximum(_ref_bn_ncw(h, p['enc_bn0_g'], p['enc_bn0_b']), 0.0)
    h = _ref_conv1d(h, p['enc_conv1_w'], p['enc_conv1_b'], STRIDE[1], KERNEL[1] // 2)
    h = _ref_bn_ncw(h, p['enc_bn1_g'], p['enc_bn1_b'])
    u = ux @ p['ue_l1_w'] + p['ue_l1_b']
    u = jnp.maximum(_ref_bn_2d(u, p['ue_bn1_g'], p['ue_bn1_b']), 0.0)
    u = u @ p['ue_l2_w'] + p['ue_l2_b']
    u = _ref_bn_2d(u, p['ue_bn2_g'], p['ue_bn2_b'])
    flat = h.reshape(h.shape[0], -1)                      # channel-major flatten
    combined = jnp.concatenate([flat, u], axis=1)
    shared = combined @ p['lat_w'] + p['lat_b']
    reshaped = shared.reshape(-1, OUT_CH[1], W1)
    d = _ref_tconv1d(reshaped, p['dec_tconv0_w'], p['dec_tconv0_b'],
                     STRIDE[1], DEC_PAD0, DEC_OUTPAD0)
    d = jnp.maximum(d, 0.0)
    d = _ref_tconv1d(d, p['dec_out_w'], p['dec_out_b'],
                     STRIDE[0], DEC_PAD1, DEC_OUTPAD1)
    ud = jnp.maximum(shared @ p['ud_l1_w'] + p['ud_l1_b'], 0.0)
    ud = ud @ p['ud_l2_w'] + p['ud_l2_b']
    return d, None, ud, None


# ----------------------------------------------------------------------------
if __name__ == "__main__":
    key = jax.random.PRNGKey(0)
    k_params, k_struct, k_unstruct = jax.random.split(key, 3)
    params = init_params(k_params)
    struct_x = jax.random.normal(k_struct, (B, C_IN, W_IN), dtype=jnp.float32)
    unstruct_x = jax.random.normal(k_unstruct, (B, U_IN), dtype=jnp.float32)

    fwd = jax.jit(make_fused_forward(params))
    phy, char, unstr, shared = fwd(struct_x, unstruct_x)
    jax.block_until_ready(phy)
    jax.block_until_ready(unstr)

    assert phy.shape == (B, C_IN, W_IN)
    assert unstr.shape == (B, U_IN)
    assert char is None and shared is None

    # correctness check against a literal pure-JAX reference
    phy_ref, _, unstr_ref, _ = aecnn_reference(params, struct_x, unstruct_x)
    np.testing.assert_allclose(np.asarray(phy), np.asarray(phy_ref),
                               rtol=1e-3, atol=1e-3)
    np.testing.assert_allclose(np.asarray(unstr), np.asarray(unstr_ref),
                               rtol=1e-3, atol=1e-3)

    print("KERNEL_OK")
</pallas_src>

<mosaic_0001>
module attributes {stable_mosaic.version = 11 : i64} {
  func.func @_fused_kernel(%arg0: memref<2x64xf32, #tpu.memory_space<vmem>>, %arg1: memref<2x8xf32, #tpu.memory_space<vmem>>, %arg2: memref<1352x128xf32, #tpu.memory_space<vmem>>, %arg3: memref<16x128xf32, #tpu.memory_space<vmem>>, %arg4: memref<2x128xf32, #tpu.memory_space<vmem>>) attributes {dimension_semantics = [], scalar_prefetch = 0 : i64, scratch_operands = 0 : i64, tpu.core_type = #tpu.core_type<tc>} {
    %c0 = arith.constant 0 : index
    %c0_0 = arith.constant 0 : index
    %0 = vector.load %arg0[%c0, %c0_0] : memref<2x64xf32, #tpu.memory_space<vmem>>, vector<2x64xf32>
    %c0_1 = arith.constant 0 : index
    %c0_2 = arith.constant 0 : index
    %1 = vector.load %arg2[%c0_1, %c0_2] : memref<1352x128xf32, #tpu.memory_space<vmem>>, vector<64x128xf32>
    %cst = arith.constant dense<0.000000e+00> : vector<2x128xf32>
    %2 = tpu.matmul %0, %1, %cst {dimension_numbers = #tpu.dot_dimension_numbers<[1], [0], [0], [1], [0, 0, 1, 1], [], []>} : vector<2x64xf32>, vector<64x128xf32>, vector<2x128xf32> -> vector<2x128xf32>
    %c0_3 = arith.constant 0 : index
    %c0_4 = arith.constant 0 : index
    %3 = vector.load %arg3[%c0_3, %c0_4] : memref<16x128xf32, #tpu.memory_space<vmem>>, vector<1x128xf32>
    %4 = vector.broadcast %3 : vector<1x128xf32> to vector<2x128xf32>
    %5 = arith.addf %2, %4 : vector<2x128xf32>
    %c64 = arith.constant 64 : index
    %c0_5 = arith.constant 0 : index
    %6 = vector.load %arg2[%c64, %c0_5] : memref<1352x128xf32, #tpu.memory_space<vmem>>, vector<128x128xf32>
    %c1 = arith.constant 1 : index
    %c0_6 = arith.constant 0 : index
    %7 = vector.load %arg3[%c1, %c0_6] : memref<16x128xf32, #tpu.memory_space<vmem>>, vector<1x128xf32>
    %c2 = arith.constant 2 : index
    %c0_7 = arith.constant 0 : index
    %8 = vector.load %arg3[%c2, %c0_7] : memref<16x128xf32, #tpu.memory_space<vmem>>, vector<1x128xf32>
    %cst_8 = arith.constant dense<0.000000e+00> : vector<128xf32>
    %9 = vector.multi_reduction <add>, %5, %cst_8 [0] : vector<2x128xf32> to vector<128xf32>
    %10 = vector.shape_cast %9 : vector<128xf32> to vector<1x128xf32>
    %cst_9 = arith.constant 2.000000e+00 : f32
    %11 = vector.broadcast %cst_9 : f32 to vector<1x128xf32>
    %12 = arith.divf %10, %11 : vector<1x128xf32>
    %13 = arith.mulf %5, %5 : vector<2x128xf32>
    %cst_10 = arith.constant dense<0.000000e+00> : vector<128xf32>
    %14 = vector.multi_reduction <add>, %13, %cst_10 [0] : vector<2x128xf32> to vector<128xf32>
    %15 = vector.shape_cast %14 : vector<128xf32> to vector<1x128xf32>
    %cst_11 = arith.constant 2.000000e+00 : f32
    %16 = vector.broadcast %cst_11 : f32 to vector<1x128xf32>
    %17 = arith.divf %15, %16 : vector<1x128xf32>
    %18 = tpu.concatenate %12, %17 in 0 : vector<1x128xf32>, vector<1x128xf32> -> vector<2x128xf32>
    %cst_12 = arith.constant dense<0.000000e+00> : vector<2x128xf32>
    %19 = tpu.matmul %18, %6, %cst_12 {dimension_numbers = #tpu.dot_dimension_numbers<[1], [0], [0], [1], [0, 0, 1, 1], [], []>} : vector<2x128xf32>, vector<128x128xf32>, vector<2x128xf32> -> vector<2x128xf32>
    %20 = vector.extract_strided_slice %19 {offsets = [0, 0], sizes = [1, 128], strides = [1, 1]} : vector<2x128xf32> to vector<1x128xf32>
    %21 = vector.extract_strided_slice %19 {offsets = [1, 0], sizes = [1, 128], strides = [1, 1]} : vector<2x128xf32> to vector<1x128xf32>
    %22 = arith.mulf %20, %20 : vector<1x128xf32>
    %23 = arith.subf %21, %22 : vector<1x128xf32>
    %24 = vector.broadcast %20 : vector<1x128xf32> to vector<2x128xf32>
    %25 = arith.subf %5, %24 : vector<2x128xf32>
    %cst_13 = arith.constant 9.99999974E-6 : f32
    %26 = vector.broadcast %cst_13 : f32 to vector<1x128xf32>
    %27 = arith.addf %23, %26 : vector<1x128xf32>
    %28 = math.rsqrt %27 : vector<1x128xf32>
    %29 = vector.broadcast %28 : vector<1x128xf32> to vector<2x128xf32>
    %30 = arith.mulf %25, %29 : vector<2x128xf32>
    %31 = vector.broadcast %7 : vector<1x128xf32> to vector<2x128xf32>
    %32 = arith.mulf %30, %31 : vector<2x128xf32>
    %33 = vector.broadcast %8 : vector<1x128xf32> to vector<2x128xf32>
    %34 = arith.addf %32, %33 : vector<2x128xf32>
    %cst_14 = arith.constant 0.000000e+00 : f32
    %35 = vector.broadcast %cst_14 : f32 to vector<2x128xf32>
    %36 = arith.maximumf %34, %35 : vector<2x128xf32>
    %c192 = arith.constant 192 : index
    %c0_15 = arith.constant 0 : index
    %37 = vector.load %arg2[%c192, %c0_15] : memref<1352x128xf32, #tpu.memory_space<vmem>>, vector<128x128xf32>
    %cst_16 = arith.constant dense<0.000000e+00> : vector<2x128xf32>
    %38 = tpu.matmul %36, %37, %cst_16 {dimension_numbers = #tpu.dot_dimension_numbers<[1], [0], [0], [1], [0, 0, 1, 1], [], []>} : vector<2x128xf32>, vector<128x128xf32>, vector<2x128xf32> -> vector<2x128xf32>
    %c3 = arith.constant 3 : index
    %c0_17 = arith.constant 0 : index
    %39 = vector.load %arg3[%c3, %c0_17] : memref<16x128xf32, #tpu.memory_space<vmem>>, vector<1x128xf32>
    %40 = vector.broadcast %39 : vector<1x128xf32> to vector<2x128xf32>
    %41 = arith.addf %38, %40 : vector<2x128xf32>
    %c320 = arith.constant 320 : index
    %c0_18 = arith.constant 0 : index
    %42 = vector.load %arg2[%c320, %c0_18] : memref<1352x128xf32, #tpu.memory_space<vmem>>, vector<128x128xf32>
    %c4 = arith.constant 4 : index
    %c0_19 = arith.constant 0 : index
    %43 = vector.load %arg3[%c4, %c0_19] : memref<16x128xf32, #tpu.memory_space<vmem>>, vector<1x128xf32>
    %c5 = arith.constant 5 : index
    %c0_20 = arith.constant 0 : index
    %44 = vector.load %arg3[%c5, %c0_20] : memref<16x128xf32, #tpu.memory_space<vmem>>, vector<1x128xf32>
    %cst_21 = arith.constant dense<0.000000e+00> : vector<128xf32>
    %45 = vector.multi_reduction <add>, %41, %cst_21 [0] : vector<2x128xf32> to vector<128xf32>
    %46 = vector.shape_cast %45 : vector<128xf32> to vector<1x128xf32>
    %cst_22 = arith.constant 2.000000e+00 : f32
    %47 = vector.broadcast %cst_22 : f32 to vector<1x128xf32>
    %48 = arith.divf %46, %47 : vector<1x128xf32>
    %49 = arith.mulf %41, %41 : vector<2x128xf32>
    %cst_23 = arith.constant dense<0.000000e+00> : vector<128xf32>
    %50 = vector.multi_reduction <add>, %49, %cst_23 [0] : vector<2x128xf32> to vector<128xf32>
    %51 = vector.shape_cast %50 : vector<128xf32> to vector<1x128xf32>
    %cst_24 = arith.constant 2.000000e+00 : f32
    %52 = vector.broadcast %cst_24 : f32 to vector<1x128xf32>
    %53 = arith.divf %51, %52 : vector<1x128xf32>
    %54 = tpu.concatenate %48, %53 in 0 : vector<1x128xf32>, vector<1x128xf32> -> vector<2x128xf32>
    %cst_25 = arith.constant dense<0.000000e+00> : vector<2x128xf32>
    %55 = tpu.matmul %54, %42, %cst_25 {dimension_numbers = #tpu.dot_dimension_numbers<[1], [0], [0], [1], [0, 0, 1, 1], [], []>} : vector<2x128xf32>, vector<128x128xf32>, vector<2x128xf32> -> vector<2x128xf32>
    %56 = vector.extract_strided_slice %55 {offsets = [0, 0], sizes = [1, 128], strides = [1, 1]} : vector<2x128xf32> to vector<1x128xf32>
    %57 = vector.extract_strided_slice %55 {offsets = [1, 0], sizes = [1, 128], strides = [1, 1]} : vector<2x128xf32> to vector<1x128xf32>
    %58 = arith.mulf %56, %56 : vector<1x128xf32>
    %59 = arith.subf %57, %58 : vector<1x128xf32>
    %60 = vector.broadcast %56 : vector<1x128xf32> to vector<2x128xf32>
    %61 = arith.subf %41, %60 : vector<2x128xf32>
    %cst_26 = arith.constant 9.99999974E-6 : f32
    %62 = vector.broadcast %cst_26 : f32 to vector<1x128xf32>
    %63 = arith.addf %59, %62 : vector<1x128xf32>
    %64 = math.rsqrt %63 : vector<1x128xf32>
    %65 = vector.broadcast %64 : vector<1x128xf32> to vector<2x128xf32>
    %66 = arith.mulf %61, %65 : vector<2x128xf32>
    %67 = vector.broadcast %43 : vector<1x128xf32> to vector<2x128xf32>
    %68 = arith.mulf %66, %67 : vector<2x128xf32>
    %69 = vector.broadcast %44 : vector<1x128xf32> to vector<2x128xf32>
    %70 = arith.addf %68, %69 : vector<2x128xf32>
    %c0_27 = arith.constant 0 : index
    %c0_28 = arith.constant 0 : index
    %71 = vector.load %arg1[%c0_27, %c0_28] : memref<2x8xf32, #tpu.memory_space<vmem>>, vector<2x8xf32>
    %c448 = arith.constant 448 : index
    %c0_29 = arith.constant 0 : index
    %72 = vector.load %arg2[%c448, %c0_29] : memref<1352x128xf32, #tpu.memory_space<vmem>>, vector<8x128xf32>
    %cst_30 = arith.constant dense<0.000000e+00> : vector<2x128xf32>
    %73 = tpu.matmul %71, %72, %cst_30 {dimension_numbers = #tpu.dot_dimension_numbers<[1], [0], [0], [1], [0, 0, 1, 1], [], []>} : vector<2x8xf32>, vector<8x128xf32>, vector<2x128xf32> -> vector<2x128xf32>
    %c6 = arith.constant 6 : index
    %c0_31 = arith.constant 0 : index
    %74 = vector.load %arg3[%c6, %c0_31] : memref<16x128xf32, #tpu.memory_space<vmem>>, vector<1x128xf32>
    %75 = vector.broadcast %74 : vector<1x128xf32> to vector<2x128xf32>
    %76 = arith.addf %73, %75 : vector<2x128xf32>
    %c7 = arith.constant 7 : index
    %c0_32 = arith.constant 0 : index
    %77 = vector.load %arg3[%c7, %c0_32] : memref<16x128xf32, #tpu.memory_space<vmem>>, vector<1x128xf32>
    %c8 = arith.constant 8 : index
    %c0_33 = arith.constant 0 : index
    %78 = vector.load %arg3[%c8, %c0_33] : memref<16x128xf32, #tpu.memory_space<vmem>>, vector<1x128xf32>
    %cst_34 = arith.constant dense<0.000000e+00> : vector<128xf32>
    %79 = vector.multi_reduction <add>, %76, %cst_34 [0] : vector<2x128xf32> to vector<128xf32>
    %80 = vector.shape_cast %79 : vector<128xf32> to vector<1x128xf32>
    %cst_35 = arith.constant 2.000000e+00 : f32
    %81 = vector.broadcast %cst_35 : f32 to vector<1x128xf32>
    %82 = arith.divf %80, %81 : vector<1x128xf32>
    %83 = vector.broadcast %82 : vector<1x128xf32> to vector<2x128xf32>
    %84 = arith.subf %76, %83 : vector<2x128xf32>
    %85 = arith.mulf %84, %84 : vector<2x128xf32>
    %cst_36 = arith.constant dense<0.000000e+00> : vector<128xf32>
    %86 = vector.multi_reduction <add>, %85, %cst_36 [0] : vector<2x128xf32> to vector<128xf32>
    %87 = vector.shape_cast %86 : vector<128xf32> to vector<1x128xf32>
    %cst_37 = arith.constant 2.000000e+00 : f32
    %88 = vector.broadcast %cst_37 : f32 to vector<1x128xf32>
    %89 = arith.divf %87, %88 : vector<1x128xf32>
    %cst_38 = arith.constant 9.99999974E-6 : f32
    %90 = vector.broadcast %cst_38 : f32 to vector<1x128xf32>
    %91 = arith.addf %89, %90 : vector<1x128xf32>
    %92 = math.rsqrt %91 : vector<1x128xf32>
    %93 = vector.broadcast %92 : vector<1x128xf32> to vector<2x128xf32>
    %94 = arith.mulf %84, %93 : vector<2x128xf32>
    %95 = vector.broadcast %77 : vector<1x128xf32> to vector<2x128xf32>
    %96 = arith.mulf %94, %95 : vector<2x128xf32>
    %97 = vector.broadcast %78 : vector<1x128xf32> to vector<2x128xf32>
    %98 = arith.addf %96, %97 : vector<2x128xf32>
    %cst_39 = arith.constant 0.000000e+00 : f32
    %99 = vector.broadcast %cst_39 : f32 to vector<2x128xf32>
    %100 = arith.maximumf %98, %99 : vector<2x128xf32>
    %c456 = arith.constant 456 : index
    %c0_40 = arith.constant 0 : index
    %101 = vector.load %arg2[%c456, %c0_40] : memref<1352x128xf32, #tpu.memory_space<vmem>>, vector<128x128xf32>
    %cst_41 = arith.constant dense<0.000000e+00> : vector<2x128xf32>
    %102 = tpu.matmul %100, %101, %cst_41 {dimension_numbers = #tpu.dot_dimension_numbers<[1], [0], [0], [1], [0, 0, 1, 1], [], []>} : vector<2x128xf32>, vector<128x128xf32>, vector<2x128xf32> -> vector<2x128xf32>
    %c9 = arith.constant 9 : index
    %c0_42 = arith.constant 0 : index
    %103 = vector.load %arg3[%c9, %c0_42] : memref<16x128xf32, #tpu.memory_space<vmem>>, vector<1x128xf32>
    %104 = vector.broadcast %103 : vector<1x128xf32> to vector<2x128xf32>
    %105 = arith.addf %102, %104 : vector<2x128xf32>
    %c10 = arith.constant 10 : index
    %c0_43 = arith.constant 0 : index
    %106 = vector.load %arg3[%c10, %c0_43] : memref<16x128xf32, #tpu.memory_space<vmem>>, vector<1x128xf32>
    %c11 = arith.constant 11 : index
    %c0_44 = arith.constant 0 : index
    %107 = vector.load %arg3[%c11, %c0_44] : memref<16x128xf32, #tpu.memory_space<vmem>>, vector<1x128xf32>
    %cst_45 = arith.constant dense<0.000000e+00> : vector<128xf32>
    %108 = vector.multi_reduction <add>, %105, %cst_45 [0] : vector<2x128xf32> to vector<128xf32>
    %109 = vector.shape_cast %108 : vector<128xf32> to vector<1x128xf32>
    %cst_46 = arith.constant 2.000000e+00 : f32
    %110 = vector.broadcast %cst_46 : f32 to vector<1x128xf32>
    %111 = arith.divf %109, %110 : vector<1x128xf32>
    %112 = vector.broadcast %111 : vector<1x128xf32> to vector<2x128xf32>
    %113 = arith.subf %105, %112 : vector<2x128xf32>
    %114 = arith.mulf %113, %113 : vector<2x128xf32>
    %cst_47 = arith.constant dense<0.000000e+00> : vector<128xf32>
    %115 = vector.multi_reduction <add>, %114, %cst_47 [0] : vector<2x128xf32> to vector<128xf32>
    %116 = vector.shape_cast %115 : vector<128xf32> to vector<1x128xf32>
    %cst_48 = arith.constant 2.000000e+00 : f32
    %117 = vector.broadcast %cst_48 : f32 to vector<1x128xf32>
    %118 = arith.divf %116, %117 : vector<1x128xf32>
    %cst_49 = arith.constant 9.99999974E-6 : f32
    %119 = vector.broadcast %cst_49 : f32 to vector<1x128xf32>
    %120 = arith.addf %118, %119 : vector<1x128xf32>
    %121 = math.rsqrt %120 : vector<1x128xf32>
    %122 = vector.broadcast %121 : vector<1x128xf32> to vector<2x128xf32>
    %123 = arith.mulf %113, %122 : vector<2x128xf32>
    %124 = vector.broadcast %106 : vector<1x128xf32> to vector<2x128xf32>
    %125 = arith.mulf %123, %124 : vector<2x128xf32>
    %126 = vector.broadcast %107 : vector<1x128xf32> to vector<2x128xf32>
    %127 = arith.addf %125, %126 : vector<2x128xf32>
    %128 = tpu.concatenate %70, %127 in 1 : vector<2x128xf32>, vector<2x128xf32> -> vector<2x256xf32>
    %c584 = arith.constant 584 : index
    %c0_50 = arith.constant 0 : index
    %129 = vector.load %arg2[%c584, %c0_50] : memref<1352x128xf32, #tpu.memory_space<vmem>>, vector<256x128xf32>
    %cst_51 = arith.constant dense<0.000000e+00> : vector<2x128xf32>
    %130 = tpu.matmul %128, %129, %cst_51 {dimension_numbers = #tpu.dot_dimension_numbers<[1], [0], [0], [1], [0, 0, 1, 1], [], []>} : vector<2x256xf32>, vector<256x128xf32>, vector<2x128xf32> -> vector<2x128xf32>
    %c12 = arith.constant 12 : index
    %c0_52 = arith.constant 0 : index
    %131 = vector.load %arg3[%c12, %c0_52] : memref<16x128xf32, #tpu.memory_space<vmem>>, vector<1x128xf32>
    %132 = vector.broadcast %131 : vector<1x128xf32> to vector<2x128xf32>
    %133 = arith.addf %130, %132 : vector<2x128xf32>
    %c840 = arith.constant 840 : index
    %c0_53 = arith.constant 0 : index
    %134 = vector.load %arg2[%c840, %c0_53] : memref<1352x128xf32, #tpu.memory_space<vmem>>, vector<128x128xf32>
    %cst_54 = arith.constant dense<0.000000e+00> : vector<2x128xf32>
    %135 = tpu.matmul %133, %134, %cst_54 {dimension_numbers = #tpu.dot_dimension_numbers<[1], [0], [0], [1], [0, 0, 1, 1], [], []>} : vector<2x128xf32>, vector<128x128xf32>, vector<2x128xf32> -> vector<2x128xf32>
    %c13 = arith.constant 13 : index
    %c0_55 = arith.constant 0 : index
    %136 = vector.load %arg3[%c13, %c0_55] : memref<16x128xf32, #tpu.memory_space<vmem>>, vector<1x128xf32>
    %137 = vector.broadcast %136 : vector<1x128xf32> to vector<2x128xf32>
    %138 = arith.addf %135, %137 : vector<2x128xf32>
    %cst_56 = arith.constant 0.000000e+00 : f32
    %139 = vector.broadcast %cst_56 : f32 to vector<2x128xf32>
    %140 = arith.maximumf %138, %139 : vector<2x128xf32>
    %c968 = arith.constant 968 : index
    %c0_57 = arith.constant 0 : index
    %141 = vector.load %arg2[%c968, %c0_57] : memref<1352x128xf32, #tpu.memory_space<vmem>>, vector<128x128xf32>
    %cst_58 = arith.constant dense<0.000000e+00> : vector<2x128xf32>
    %142 = tpu.matmul %133, %141, %cst_58 {dimension_numbers = #tpu.dot_dimension_numbers<[1], [0], [0], [1], [0, 0, 1, 1], [], []>} : vector<2x128xf32>, vector<128x128xf32>, vector<2x128xf32> -> vector<2x128xf32>
    %c14 = arith.constant 14 : index
    %c0_59 = arith.constant 0 : index
    %143 = vector.load %arg3[%c14, %c0_59] : memref<16x128xf32, #tpu.memory_space<vmem>>, vector<1x128xf32>
    %144 = vector.broadcast %143 : vector<1x128xf32> to vector<2x128xf32>
    %145 = arith.addf %142, %144 : vector<2x128xf32>
    %cst_60 = arith.constant 0.000000e+00 : f32
    %146 = vector.broadcast %cst_60 : f32 to vector<2x128xf32>
    %147 = arith.maximumf %145, %146 : vector<2x128xf32>
    %148 = tpu.concatenate %140, %147 in 1 : vector<2x128xf32>, vector<2x128xf32> -> vector<2x256xf32>
    %c1096 = arith.constant 1096 : index
    %c0_61 = arith.constant 0 : index
    %149 = vector.load %arg2[%c1096, %c0_61] : memref<1352x128xf32, #tpu.memory_space<vmem>>, vector<256x128xf32>
    %cst_62 = arith.constant dense<0.000000e+00> : vector<2x128xf32>
    %150 = tpu.matmul %148, %149, %cst_62 {dimension_numbers = #tpu.dot_dimension_numbers<[1], [0], [0], [1], [0, 0, 1, 1], [], []>} : vector<2x256xf32>, vector<256x128xf32>, vector<2x128xf32> -> vector<2x128xf32>
    %c15 = arith.constant 15 : index
    %c0_63 = arith.constant 0 : index
    %151 = vector.load %arg3[%c15, %c0_63] : memref<16x128xf32, #tpu.memory_space<vmem>>, vector<1x128xf32>
    %152 = vector.broadcast %151 : vector<1x128xf32> to vector<2x128xf32>
    %153 = arith.addf %150, %152 : vector<2x128xf32>
    %c0_64 = arith.constant 0 : index
    %c0_65 = arith.constant 0 : index
    %154 = vector.load %arg4[%c0_64, %c0_65] : memref<2x128xf32, #tpu.memory_space<vmem>>, vector<2x128xf32>
    tpu.vector_store %arg4[%c0_64, %c0_65], %153 {strides = array<i32>} : memref<2x128xf32, #tpu.memory_space<vmem>>, vector<2x128xf32>,
    return
  }
}

</mosaic_0001>

<llo_original>
// kernel: forward.1
$region0: #{forward.1}
  #allocation0 [shape = 'u32[]', space=smem, size = 0x4, offset = 0x4, fixed_abs, tag = 'smem constant byte address 0x4 - core index']
  #allocation1 [shape = 'u32[72,128]{1,0:T(1,128)}', space=vmem, size = 0x9000, scoped, tag = 'internal scratch']
  %s0 = inlined_call_operand.vmem [shape: f32[2,64], index: 0, kind: input, shape index: {}]
  %s1 = inlined_call_operand.vmem [shape: f32[2,8], index: 1, kind: input, shape index: {}]
  %s2 = inlined_call_operand.hbm [shape: f32[1352,128], index: 2, kind: input, shape index: {}]
  %s3 = inlined_call_operand.hbm [shape: f32[16,128], index: 3, kind: input, shape index: {}]
  %s4 = inlined_call_operand.vmem [shape: f32[2,128], index: 4, kind: output, shape index: {}]
  %s5 = sld [smem:[#allocation0]]
  $region34: #{forward.1} parent=0
    _
  %s7 = ssub.s32 1, %s5
  %s8 = scalar_select 0, %s7, %s5
  $region1: #{forward.1} parent=0
    #allocation2 [shape = 'u8[692224]{0}', space=vmem, size = 0xa9000, scoped, tag = 'input window, operand 2, single buffered']
    #allocation3 [shape = 's32[1]{0}', space=sflag, size = 0x4, scoped, tag = 'scoped memory for forward.1']
    #allocation4 [shape = 'u8[8192]{0}', space=vmem, size = 0x2000, scoped, tag = 'input window, operand 3, single buffered']
    #allocation5 [shape = 's32[1]{0}', space=sflag, size = 0x4, scoped, tag = 'scoped memory for forward.1']
    %9 = vsyncpa [#allocation3], 0
    %10 = vsyncpa [#allocation5], 0
    // Predicated region
    $region2: #{forward.1} parent=1 // pred_check
      _
    $region3: #{forward.1} parent=1 // pred_check_branch
      %12 = sbr.rel (0) target = $region5
    $region4: #{forward.1} parent=1 // pred_region
      _
    $region5: #{forward.1} parent=1 // pred_fallthru
      _
    // Predicated region
    $region6: #{forward.1} parent=1 // pred_check
      _
    $region7: #{forward.1} parent=1 // pred_check_branch
      %14 = sbr.rel (0) target = $region9
    $region8: #{forward.1} parent=1 // pred_region
      _
    $region9: #{forward.1} parent=1 // pred_fallthru
      _
    // Predicated region
    $region10: #{forward.1} parent=1 // pred_check
      _
    $region11: #{forward.1} parent=1 // pred_check_branch
      %16 = sbr.rel (0) target = $region13
    $region12: #{forward.1} parent=1 // pred_region
      %18 = vsyncadd [#allocation3], 0
      %s19 = sshll.u32 %s2, 4
      %s20 = int_to_ptr.hbm [resolvable:$true] %s19
      %s21 = sshll.u32 [#allocation2], 4
      %s22 = int_to_ptr.vmem [resolvable:$true] %s21
      %27 = dma.hbm_to_vmem [thread:$0]  %s20, 21632, %s22, [#allocation3], 128, 128, 8
    $region13: #{forward.1} parent=1 // pred_fallthru
      _
    // Predicated region
    $region14: #{forward.1} parent=1 // pred_check
      _
    $region15: #{forward.1} parent=1 // pred_check_branch
      %29 = sbr.rel (0) target = $region17
    $region16: #{forward.1} parent=1 // pred_region
      %31 = vsyncadd [#allocation5], 0
      %s32 = sshll.u32 %s3, 4
      %s33 = int_to_ptr.hbm [resolvable:$true] %s32
      %s34 = sshll.u32 [#allocation4], 4
      %s35 = int_to_ptr.vmem [resolvable:$true] %s34
      %40 = dma.hbm_to_vmem [thread:$0]  %s33, 256, %s35, [#allocation5], 128, 128, 8
    $region17: #{forward.1} parent=1 // pred_fallthru
      _
    // Predicated region
    $region18: #{forward.1} parent=1 // pred_check
      _
    $region19: #{forward.1} parent=1 // pred_check_branch
      %42 = sbr.rel (0) target = $region21
    $region20: #{forward.1} parent=1 // pred_region
      %44 = dma.done [#allocation3], 21632
    $region21: #{forward.1} parent=1 // pred_fallthru
      _
    // Predicated region
    $region22: #{forward.1} parent=1 // pred_check
      _
    $region23: #{forward.1} parent=1 // pred_check_branch
      %46 = sbr.rel (0) target = $region25
    $region24: #{forward.1} parent=1 // pred_region
      %48 = dma.done [#allocation5], 256
    $region25: #{forward.1} parent=1 // pred_fallthru
      _
    %v49 = vld [vmem:[%s0] sm:$0x3]
    %v50 = vld [vmem:[#allocation2] sm:$0xff]
    %v51 = vld [vmem:[#allocation2 + $0x8] sm:$0xff]
    %v52 = vld [vmem:[#allocation2 + $0x10] sm:$0xff]
    %v53 = vld [vmem:[#allocation2 + $0x18] sm:$0xff]
    %v54 = vld [vmem:[#allocation2 + $0x20] sm:$0xff]
    %v55 = vld [vmem:[#allocation2 + $0x28] sm:$0xff]
    %v56 = vld [vmem:[#allocation2 + $0x30] sm:$0xff]
    %v57 = vld [vmem:[#allocation2 + $0x38] sm:$0xff]
    %v58 = vld [vmem:[#allocation4] sm:$0x1]
    %v59 = vperm.slane %v58, 0
    %vm60 = vcmask 523264
    %v62 = vsel %vm60, %v49, 0
    %64 = vmatpush.msra.mxu0 0.0
    %65 = vmatpush.msra.mxu0 0.0
    %66 = vmatpush.msra.mxu0 0.0
    %67 = vmatpush.msra.mxu0 0.0
    %68 = vmatpush.msra.mxu0 0.0
    %69 = vmatpush.msra.mxu0 0.0
    %70 = vmatpush.msra.mxu0 0.0
    %71 = vmatpush.msra.mxu0 0.0
    %72 = vmatpush.msra.mxu0 %v57
    %73 = vmatpush.msra.mxu0 %v56
    %74 = vmatpush.msra.mxu0 %v55
    %75 = vmatpush.msra.mxu0 %v54
    %76 = vmatpush.msra.mxu0 %v53
    %77 = vmatpush.msra.mxu0 %v52
    %78 = vmatpush.msra.mxu0 %v51
    %79 = vmatpush.msra.mxu0 %v50
    %80 = vmatmul.f32.gmra.mxu0 %v62
    %v81 = vpop.f32.mrf.mxu0
    %v82 = vadd.f32 %v59, %v81
    %83 = vdwg.mxu0
    %v84 = vld [vmem:[#allocation2 + $0x40] sm:$0xff]
    %v85 = vld [vmem:[#allocation2 + $0x48] sm:$0xff]
    %v86 = vld [vmem:[#allocation2 + $0x50] sm:$0xff]
    %v87 = vld [vmem:[#allocation2 + $0x58] sm:$0xff]
    %v88 = vld [vmem:[#allocation2 + $0x60] sm:$0xff]
    %v89 = vld [vmem:[#allocation2 + $0x68] sm:$0xff]
    %v90 = vld [vmem:[#allocation2 + $0x70] sm:$0xff]
    %v91 = vld [vmem:[#allocation2 + $0x78] sm:$0xff]
    %v92 = vld [vmem:[#allocation2 + $0x80] sm:$0xff]
    %v93 = vld [vmem:[#allocation2 + $0x88] sm:$0xff]
    %v94 = vld [vmem:[#allocation2 + $0x90] sm:$0xff]
    %v95 = vld [vmem:[#allocation2 + $0x98] sm:$0xff]
    %v96 = vld [vmem:[#allocation2 + $0xa0] sm:$0xff]
    %v97 = vld [vmem:[#allocation2 + $0xa8] sm:$0xff]
    %v98 = vld [vmem:[#allocation2 + $0xb0] sm:$0xff]
    %v99 = vld [vmem:[#allocation2 + $0xb8] sm:$0xff]
    %v100 = vld [vmem:[#allocation4 + $0x1] sm:$0x1]
    %v101 = vld [vmem:[#allocation4 + $0x2] sm:$0x1]
    %vm102 = vcmask 1041408
    %v103 = vsel %vm102, %v82, 0.0
    %v104 = vrot.slane %v103, 4
    %v105 = vadd.f32 %v103, %v104
    %v106 = vrot.slane %v105, 2
    %v107 = vadd.f32 %v105, %v106
    %v108 = vrot.slane %v107, 1
    %v109 = vadd.f32 %v107, %v108
    %v110 = vrcp.pop 2.0
    %v111 = vmul.f32 2.0, %v110
    %v112 = vsub.f32 1.0, %v111
    %v113 = vmul.f32 %v110, %v112
    %v114 = vadd.f32 %v110, %v113
    %vm115 = vweird.f32 %v110
    %v116 = vsel %vm115, %v110, %v114
    %v117 = vmul.f32 %v109, %v116
    %v118 = vmul.f32 %v82, %v82
    %v119 = vsel %vm102, %v118, 0.0
    %v120 = vrot.slane %v119, 4
    %v121 = vadd.f32 %v119, %v120
    %v122 = vrot.slane %v121, 2
    %v123 = vadd.f32 %v121, %v122
    %v124 = vrot.slane %v123, 1
    %v125 = vadd.f32 %v123, %v124
    %v126 = vmul.f32 %v125, %v116
    %vm127 = vcmask 1040384
    %v128 = vsel %vm127, %v117, %v126
    %129 = vmatpush.msra.mxu0 %v99
    %130 = vmatpush.msra.mxu0 %v98
    %131 = vmatpush.msra.mxu0 %v97
    %132 = vmatpush.msra.mxu0 %v96
    %133 = vmatpush.msra.mxu0 %v95
    %134 = vmatpush.msra.mxu0 %v94
    %135 = vmatpush.msra.mxu0 %v93
    %136 = vmatpush.msra.mxu0 %v92
    %137 = vmatpush.msra.mxu0 %v91
    %138 = vmatpush.msra.mxu0 %v90
    %139 = vmatpush.msra.mxu0 %v89
    %140 = vmatpush.msra.mxu0 %v88
    %141 = vmatpush.msra.mxu0 %v87
    %142 = vmatpush.msra.mxu0 %v86
    %143 = vmatpush.msra.mxu0 %v85
    %144 = vmatpush.msra.mxu0 %v84
    %145 = vmatmul.f32.gmra.mxu0 %v128
    %v146 = vpop.f32.mrf.mxu0
    %v147 = vadd.f32 0.0, %v146
    %148 = vdwg.mxu0
    %v149 = vmul.f32 %v147, %v147
    %v151 = vrot.slane %v149, 7
    %v153 = vsub.f32 %v147, %v151
    %v154 = vperm.slane %v147, 0
    %v155 = vsub.f32 %v82, %v154
    %v156 = vadd.f32 %v153, 1e-05
    %v157 = vrsqrt.pop %v156
    %v158 = vmul.f32 %v157, %v156
    %v159 = vmul.f32 %v158, %v157
    %v160 = vmul.f32 0.5, %v159
    %v161 = vsub.f32 1.5, %v160
    %v162 = vmul.f32 %v157, %v161
    %vm163 = vweird.f32 %v156
    %vm164 = vweird.f32 %v157
    %vm165 = vmor %vm163, %vm164
    %v166 = vsel %vm165, %v157, %v162
    %v167 = vperm.slane %v166, 1
    %v168 = vmul.f32 %v155, %v167
    %v169 = vperm.slane %v100, 0
    %v170 = vmul.f32 %v168, %v169
    %v171 = vperm.slane %v101, 0
    %v172 = vadd.f32 %v170, %v171
    %v173 = vmax.f32 %v172, 0.0
    %v174 = vld [vmem:[#allocation2 + $0xc0] sm:$0xff]
    %v175 = vld [vmem:[#allocation2 + $0xc8] sm:$0xff]
    %v176 = vld [vmem:[#allocation2 + $0xd0] sm:$0xff]
    %v177 = vld [vmem:[#allocation2 + $0xd8] sm:$0xff]
    %v178 = vld [vmem:[#allocation2 + $0xe0] sm:$0xff]
    %v179 = vld [vmem:[#allocation2 + $0xe8] sm:$0xff]
    %v180 = vld [vmem:[#allocation2 + $0xf0] sm:$0xff]
    %v181 = vld [vmem:[#allocation2 + $0xf8] sm:$0xff]
    %v182 = vld [vmem:[#allocation2 + $0x100] sm:$0xff]
    %v183 = vld [vmem:[#allocation2 + $0x108] sm:$0xff]
    %v184 = vld [vmem:[#allocation2 + $0x110] sm:$0xff]
    %v185 = vld [vmem:[#allocation2 + $0x118] sm:$0xff]
    %v186 = vld [vmem:[#allocation2 + $0x120] sm:$0xff]
    %v187 = vld [vmem:[#allocation2 + $0x128] sm:$0xff]
    %v188 = vld [vmem:[#allocation2 + $0x130] sm:$0xff]
    %v189 = vld [vmem:[#allocation2 + $0x138] sm:$0xff]
    %v190 = vld [vmem:[#allocation4 + $0x3] sm:$0x1]
    %v191 = vperm.slane %v190, 0
    %192 = vmatpush.msra.mxu0 %v189
    %193 = vmatpush.msra.mxu0 %v188
    %194 = vmatpush.msra.mxu0 %v187
    %195 = vmatpush.msra.mxu0 %v186
    %196 = vmatpush.msra.mxu0 %v185
    %197 = vmatpush.msra.mxu0 %v184
    %198 = vmatpush.msra.mxu0 %v183
    %199 = vmatpush.msra.mxu0 %v182
    %200 = vmatpush.msra.mxu0 %v181
    %201 = vmatpush.msra.mxu0 %v180
    %202 = vmatpush.msra.mxu0 %v179
    %203 = vmatpush.msra.mxu0 %v178
    %204 = vmatpush.msra.mxu0 %v177
    %205 = vmatpush.msra.mxu0 %v176
    %206 = vmatpush.msra.mxu0 %v175
    %207 = vmatpush.msra.mxu0 %v174
    %208 = vmatmul.f32.gmra.mxu0 %v173
    %v209 = vpop.f32.mrf.mxu0
    %v210 = vadd.f32 %v191, %v209
    %211 = vdwg.mxu0
    %v212 = vld [vmem:[#allocation2 + $0x140] sm:$0xff]
    %v213 = vld [vmem:[#allocation2 + $0x148] sm:$0xff]
    %v214 = vld [vmem:[#allocation2 + $0x150] sm:$0xff]
    %v215 = vld [vmem:[#allocation2 + $0x158] sm:$0xff]
    %v216 = vld [vmem:[#allocation2 + $0x160] sm:$0xff]
    %v217 = vld [vmem:[#allocation2 + $0x168] sm:$0xff]
    %v218 = vld [vmem:[#allocation2 + $0x170] sm:$0xff]
    %v219 = vld [vmem:[#allocation2 + $0x178] sm:$0xff]
    %v220 = vld [vmem:[#allocation2 + $0x180] sm:$0xff]
    %v221 = vld [vmem:[#allocation2 + $0x188] sm:$0xff]
    %v222 = vld [vmem:[#allocation2 + $0x190] sm:$0xff]
    %v223 = vld [vmem:[#allocation2 + $0x198] sm:$0xff]
    %v224 = vld [vmem:[#allocation2 + $0x1a0] sm:$0xff]
    %v225 = vld [vmem:[#allocation2 + $0x1a8] sm:$0xff]
    %v226 = vld [vmem:[#allocation2 + $0x1b0] sm:$0xff]
    %v227 = vld [vmem:[#allocation2 + $0x1b8] sm:$0xff]
    %v228 = vld [vmem:[#allocation4 + $0x4] sm:$0x1]
    %v229 = vld [vmem:[#allocation4 + $0x5] sm:$0x1]
    %v230 = vsel %vm102, %v210, 0.0
    %v231 = vrot.slane %v230, 4
    %v232 = vadd.f32 %v230, %v231
    %v233 = vrot.slane %v232, 2
    %v234 = vadd.f32 %v232, %v233
    %v235 = vrot.slane %v234, 1
    %v236 = vadd.f32 %v234, %v235
    %v237 = vmul.f32 %v236, %v116
    %v238 = vmul.f32 %v210, %v210
    %v239 = vsel %vm102, %v238, 0.0
    %v240 = vrot.slane %v239, 4
    %v241 = vadd.f32 %v239, %v240
    %v242 = vrot.slane %v241, 2
    %v243 = vadd.f32 %v241, %v242
    %v244 = vrot.slane %v243, 1
    %v245 = vadd.f32 %v243, %v244
    %v246 = vmul.f32 %v245, %v116
    %v247 = vsel %vm127, %v237, %v246
    %248 = vmatpush.msra.mxu0 %v227
    %249 = vmatpush.msra.mxu0 %v226
    %250 = vmatpush.msra.mxu0 %v225
    %251 = vmatpush.msra.mxu0 %v224
    %252 = vmatpush.msra.mxu0 %v223
    %253 = vmatpush.msra.mxu0 %v222
    %254 = vmatpush.msra.mxu0 %v221
    %255 = vmatpush.msra.mxu0 %v220
    %256 = vmatpush.msra.mxu0 %v219
    %257 = vmatpush.msra.mxu0 %v218
    %258 = vmatpush.msra.mxu0 %v217
    %259 = vmatpush.msra.mxu0 %v216
    %260 = vmatpush.msra.mxu0 %v215
    %261 = vmatpush.msra.mxu0 %v214
    %262 = vmatpush.msra.mxu0 %v213
    %263 = vmatpush.msra.mxu0 %v212
    %264 = vmatmul.f32.gmra.mxu0 %v247
    %v265 = vpop.f32.mrf.mxu0
    %v266 = vadd.f32 0.0, %v265
    %267 = vdwg.mxu0
    %v268 = vmul.f32 %v266, %v266
    %v270 = vrot.slane %v268, 7
    %v272 = vsub.f32 %v266, %v270
    %v273 = vperm.slane %v266, 0
    %v274 = vsub.f32 %v210, %v273
    %v275 = vadd.f32 %v272, 1e-05
    %v276 = vrsqrt.pop %v275
    %v277 = vmul.f32 %v276, %v275
    %v278 = vmul.f32 %v277, %v276
    %v279 = vmul.f32 0.5, %v278
    %v280 = vsub.f32 1.5, %v279
    %v281 = vmul.f32 %v276, %v280
    %vm282 = vweird.f32 %v275
    %vm283 = vweird.f32 %v276
    %vm284 = vmor %vm282, %vm283
    %v285 = vsel %vm284, %v276, %v281
    %v286 = vperm.slane %v285, 1
    %v287 = vmul.f32 %v274, %v286
    %v288 = vperm.slane %v228, 0
    %v289 = vmul.f32 %v287, %v288
    %v290 = vperm.slane %v229, 0
    %v291 = vadd.f32 %v289, %v290
    %v292 = vld [vmem:[%s1] sm:$0x3]
    %v293 = vld [vmem:[#allocation2 + $0x1c0] sm:$0xff]
    %v294 = vld [vmem:[#allocation4 + $0x6] sm:$0x1]
    %v295 = vperm.slane %v294, 0
    %vm296 = vcmask 64512
    %v298 = vsel %vm296, %v292, 0
    %300 = vmatpush.msra.mxu0 0.0
    %301 = vmatpush.msra.mxu0 0.0
    %302 = vmatpush.msra.mxu0 0.0
    %303 = vmatpush.msra.mxu0 0.0
    %304 = vmatpush.msra.mxu0 0.0
    %305 = vmatpush.msra.mxu0 0.0
    %306 = vmatpush.msra.mxu0 0.0
    %307 = vmatpush.msra.mxu0 0.0
    %308 = vmatpush.msra.mxu0 0.0
    %309 = vmatpush.msra.mxu0 0.0
    %310 = vmatpush.msra.mxu0 0.0
    %311 = vmatpush.msra.mxu0 0.0
    %312 = vmatpush.msra.mxu0 0.0
    %313 = vmatpush.msra.mxu0 0.0
    %314 = vmatpush.msra.mxu0 0.0
    %315 = vmatpush.msra.mxu0 %v293
    %316 = vmatmul.f32.gmra.mxu0 %v298
    %v317 = vpop.f32.mrf.mxu0
    %v318 = vadd.f32 %v295, %v317
    %319 = vdwg.mxu0
    %v320 = vld [vmem:[#allocation4 + $0x7] sm:$0x1]
    %v321 = vld [vmem:[#allocation4 + $0x8] sm:$0x1]
    %v322 = vsel %vm102, %v318, 0.0
    %v323 = vrot.slane %v322, 4
    %v324 = vadd.f32 %v322, %v323
    %v325 = vrot.slane %v324, 2
    %v326 = vadd.f32 %v324, %v325
    %v327 = vrot.slane %v326, 1
    %v328 = vadd.f32 %v326, %v327
    %v329 = vmul.f32 %v328, %v116
    %v330 = vsub.f32 %v318, %v329
    %v331 = vmul.f32 %v330, %v330
    %v332 = vsel %vm102, %v331, 0.0
    %v333 = vrot.slane %v332, 4
    %v334 = vadd.f32 %v332, %v333
    %v335 = vrot.slane %v334, 2
    %v336 = vadd.f32 %v334, %v335
    %v337 = vrot.slane %v336, 1
    %v338 = vadd.f32 %v336, %v337
    %v339 = vmul.f32 %v338, %v116
    %v340 = vadd.f32 %v339, 1e-05
    %v341 = vrsqrt.pop %v340
    %v342 = vmul.f32 %v341, %v340
    %v343 = vmul.f32 %v342, %v341
    %v344 = vmul.f32 0.5, %v343
    %v345 = vsub.f32 1.5, %v344
    %v346 = vmul.f32 %v341, %v345
    %vm347 = vweird.f32 %v340
    %vm348 = vweird.f32 %v341
    %vm349 = vmor %vm347, %vm348
    %v350 = vsel %vm349, %v341, %v346
    %v351 = vmul.f32 %v330, %v350
    %v352 = vperm.slane %v320, 0
    %v353 = vmul.f32 %v351, %v352
    %v354 = vperm.slane %v321, 0
    %v355 = vadd.f32 %v353, %v354
    %v356 = vmax.f32 %v355, 0.0
    %v357 = vld [vmem:[#allocation2 + $0x1c8] sm:$0xff]
    %v358 = vld [vmem:[#allocation2 + $0x1d0] sm:$0xff]
    %v359 = vld [vmem:[#allocation2 + $0x1d8] sm:$0xff]
    %v360 = vld [vmem:[#allocation2 + $0x1e0] sm:$0xff]
    %v361 = vld [vmem:[#allocation2 + $0x1e8] sm:$0xff]
    %v362 = vld [vmem:[#allocation2 + $0x1f0] sm:$0xff]
    %v363 = vld [vmem:[#allocation2 + $0x1f8] sm:$0xff]
    %v364 = vld [vmem:[#allocation2 + $0x200] sm:$0xff]
    %v365 = vld [vmem:[#allocation2 + $0x208] sm:$0xff]
    %v366 = vld [vmem:[#allocation2 + $0x210] sm:$0xff]
    %v367 = vld [vmem:[#allocation2 + $0x218] sm:$0xff]
    %v368 = vld [vmem:[#allocation2 + $0x220] sm:$0xff]
    %v369 = vld [vmem:[#allocation2 + $0x228] sm:$0xff]
    %v370 = vld [vmem:[#allocation2 + $0x230] sm:$0xff]
    %v371 = vld [vmem:[#allocation2 + $0x238] sm:$0xff]
    %v372 = vld [vmem:[#allocation2 + $0x240] sm:$0xff]
    %v373 = vld [vmem:[#allocation4 + $0x9] sm:$0x1]
    %v374 = vperm.slane %v373, 0
    %375 = vmatpush.msra.mxu0 %v372
    %376 = vmatpush.msra.mxu0 %v371
    %377 = vmatpush.msra.mxu0 %v370
    %378 = vmatpush.msra.mxu0 %v369
    %379 = vmatpush.msra.mxu0 %v368
    %380 = vmatpush.msra.mxu0 %v367
    %381 = vmatpush.msra.mxu0 %v366
    %382 = vmatpush.msra.mxu0 %v365
    %383 = vmatpush.msra.mxu0 %v364
    %384 = vmatpush.msra.mxu0 %v363
    %385 = vmatpush.msra.mxu0 %v362
    %386 = vmatpush.msra.mxu0 %v361
    %387 = vmatpush.msra.mxu0 %v360
    %388 = vmatpush.msra.mxu0 %v359
    %389 = vmatpush.msra.mxu0 %v358
    %390 = vmatpush.msra.mxu0 %v357
    %391 = vmatmul.f32.gmra.mxu0 %v356
    %v392 = vpop.f32.mrf.mxu0
    %v393 = vadd.f32 %v374, %v392
    %394 = vdwg.mxu0
    %v395 = vld [vmem:[#allocation4 + $0xa] sm:$0x1]
    %v396 = vld [vmem:[#allocation4 + $0xb] sm:$0x1]
    %v397 = vsel %vm102, %v393, 0.0
    %v398 = vrot.slane %v397, 4
    %v399 = vadd.f32 %v397, %v398
    %v400 = vrot.slane %v399, 2
    %v401 = vadd.f32 %v399, %v400
    %v402 = vrot.slane %v401, 1
    %v403 = vadd.f32 %v401, %v402
    %v404 = vmul.f32 %v403, %v116
    %v405 = vsub.f32 %v393, %v404
    %v406 = vmul.f32 %v405, %v405
    %v407 = vsel %vm102, %v406, 0.0
    %v408 = vrot.slane %v407, 4
    %v409 = vadd.f32 %v407, %v408
    %v410 = vrot.slane %v409, 2
    %v411 = vadd.f32 %v409, %v410
    %v412 = vrot.slane %v411, 1
    %v413 = vadd.f32 %v411, %v412
    %v414 = vmul.f32 %v413, %v116
    %v415 = vadd.f32 %v414, 1e-05
    %v416 = vrsqrt.pop %v415
    %v417 = vmul.f32 %v416, %v415
    %v418 = vmul.f32 %v417, %v416
    %v419 = vmul.f32 0.5, %v418
    %v420 = vsub.f32 1.5, %v419
    %v421 = vmul.f32 %v416, %v420
    %vm422 = vweird.f32 %v415
    %vm423 = vweird.f32 %v416
    %vm424 = vmor %vm422, %vm423
    %v425 = vsel %vm424, %v416, %v421
    %v426 = vmul.f32 %v405, %v425
    %v427 = vperm.slane %v395, 0
    %v428 = vmul.f32 %v426, %v427
    %v429 = vperm.slane %v396, 0
    %v430 = vadd.f32 %v428, %v429
    %v431 = vld [vmem:[#allocation2 + $0x248] sm:$0xff]
    %v432 = vld [vmem:[#allocation2 + $0x250] sm:$0xff]
    %v433 = vld [vmem:[#allocation2 + $0x258] sm:$0xff]
    %v434 = vld [vmem:[#allocation2 + $0x260] sm:$0xff]
    %v435 = vld [vmem:[#allocation2 + $0x268] sm:$0xff]
    %v436 = vld [vmem:[#allocation2 + $0x270] sm:$0xff]
    %v437 = vld [vmem:[#allocation2 + $0x278] sm:$0xff]
    %v438 = vld [vmem:[#allocation2 + $0x280] sm:$0xff]
    %v439 = vld [vmem:[#allocation2 + $0x288] sm:$0xff]
    %v440 = vld [vmem:[#allocation2 + $0x290] sm:$0xff]
    %v441 = vld [vmem:[#allocation2 + $0x298] sm:$0xff]
    %v442 = vld [vmem:[#allocation2 + $0x2a0] sm:$0xff]
    %v443 = vld [vmem:[#allocation2 + $0x2a8] sm:$0xff]
    %v444 = vld [vmem:[#allocation2 + $0x2b0] sm:$0xff]
    %v445 = vld [vmem:[#allocation2 + $0x2b8] sm:$0xff]
    %v446 = vld [vmem:[#allocation2 + $0x2c0] sm:$0xff]
    %v447 = vld [vmem:[#allocation2 + $0x2c8] sm:$0xff]
    %v448 = vld [vmem:[#allocation2 + $0x2d0] sm:$0xff]
    %v449 = vld [vmem:[#allocation2 + $0x2d8] sm:$0xff]
    %v450 = vld [vmem:[#allocation2 + $0x2e0] sm:$0xff]
    %v451 = vld [vmem:[#allocation2 + $0x2e8] sm:$0xff]
    %v452 = vld [vmem:[#allocation2 + $0x2f0] sm:$0xff]
    %v453 = vld [vmem:[#allocation2 + $0x2f8] sm:$0xff]
    %v454 = vld [vmem:[#allocation2 + $0x300] sm:$0xff]
    %v455 = vld [vmem:[#allocation2 + $0x308] sm:$0xff]
    %v456 = vld [vmem:[#allocation2 + $0x310] sm:$0xff]
    %v457 = vld [vmem:[#allocation2 + $0x318] sm:$0xff]
    %v458 = vld [vmem:[#allocation2 + $0x320] sm:$0xff]
    %v459 = vld [vmem:[#allocation2 + $0x328] sm:$0xff]
    %v460 = vld [vmem:[#allocation2 + $0x330] sm:$0xff]
    %v461 = vld [vmem:[#allocation2 + $0x338] sm:$0xff]
    %v462 = vld [vmem:[#allocation2 + $0x340] sm:$0xff]
    %v463 = vld [vmem:[#allocation4 + $0xc] sm:$0x1]
    %v464 = vperm.slane %v463, 0
    %465 = vmatpush.msra.mxu0 %v446
    %466 = vmatpush.msra.mxu0 %v445
    %467 = vmatpush.msra.mxu0 %v444
    %468 = vmatpush.msra.mxu0 %v443
    %469 = vmatpush.msra.mxu0 %v442
    %470 = vmatpush.msra.mxu0 %v441
    %471 = vmatpush.msra.mxu0 %v440
    %472 = vmatpush.msra.mxu0 %v439
    %473 = vmatpush.msra.mxu0 %v438
    %474 = vmatpush.msra.mxu0 %v437
    %475 = vmatpush.msra.mxu0 %v436
    %476 = vmatpush.msra.mxu0 %v435
    %477 = vmatpush.msra.mxu0 %v434
    %478 = vmatpush.msra.mxu0 %v433
    %479 = vmatpush.msra.mxu0 %v432
    %480 = vmatpush.msra.mxu0 %v431
    %481 = vmatmul.f32.gmra.mxu0 %v291
    %v482 = vpop.f32.mrf.mxu0
    %v483 = vadd.f32 %v464, %v482
    %484 = vdwg.mxu0
    %485 = vmatpush.msra.mxu0 %v462
    %486 = vmatpush.msra.mxu0 %v461
    %487 = vmatpush.msra.mxu0 %v460
    %488 = vmatpush.msra.mxu0 %v459
    %489 = vmatpush.msra.mxu0 %v458
    %490 = vmatpush.msra.mxu0 %v457
    %491 = vmatpush.msra.mxu0 %v456
    %492 = vmatpush.msra.mxu0 %v455
    %493 = vmatpush.msra.mxu0 %v454
    %494 = vmatpush.msra.mxu0 %v453
    %495 = vmatpush.msra.mxu0 %v452
    %496 = vmatpush.msra.mxu0 %v451
    %497 = vmatpush.msra.mxu0 %v450
    %498 = vmatpush.msra.mxu0 %v449
    %499 = vmatpush.msra.mxu0 %v448
    %500 = vmatpush.msra.mxu0 %v447
    %501 = vmatmul.f32.gmra.mxu0 %v430
    %v502 = vpop.f32.mrf.mxu0
    %v503 = vadd.f32 %v483, %v502
    %504 = vdwg.mxu0
    %v505 = vld [vmem:[#allocation2 + $0x348] sm:$0xff]
    %v506 = vld [vmem:[#allocation2 + $0x350] sm:$0xff]
    %v507 = vld [vmem:[#allocation2 + $0x358] sm:$0xff]
    %v508 = vld [vmem:[#allocation2 + $0x360] sm:$0xff]
    %v509 = vld [vmem:[#allocation2 + $0x368] sm:$0xff]
    %v510 = vld [vmem:[#allocation2 + $0x370] sm:$0xff]
    %v511 = vld [vmem:[#allocation2 + $0x378] sm:$0xff]
    %v512 = vld [vmem:[#allocation2 + $0x380] sm:$0xff]
    %v513 = vld [vmem:[#allocation2 + $0x388] sm:$0xff]
    %v514 = vld [vmem:[#allocation2 + $0x390] sm:$0xff]
    %v515 = vld [vmem:[#allocation2 + $0x398] sm:$0xff]
    %v516 = vld [vmem:[#allocation2 + $0x3a0] sm:$0xff]
    %v517 = vld [vmem:[#allocation2 + $0x3a8] sm:$0xff]
    %v518 = vld [vmem:[#allocation2 + $0x3b0] sm:$0xff]
    %v519 = vld [vmem:[#allocation2 + $0x3b8] sm:$0xff]
    %v520 = vld [vmem:[#allocation2 + $0x3c0] sm:$0xff]
    %v521 = vld [vmem:[#allocation4 + $0xd] sm:$0x1]
    %v522 = vperm.slane %v521, 0
    %523 = vmatpush.msra.mxu0 %v520
    %524 = vmatpush.msra.mxu0 %v519
    %525 = vmatpush.msra.mxu0 %v518
    %526 = vmatpush.msra.mxu0 %v517
    %527 = vmatpush.msra.mxu0 %v516
    %528 = vmatpush.msra.mxu0 %v515
    %529 = vmatpush.msra.mxu0 %v514
    %530 = vmatpush.msra.mxu0 %v513
    %531 = vmatpush.msra.mxu0 %v512
    %532 = vmatpush.msra.mxu0 %v511
    %533 = vmatpush.msra.mxu0 %v510
    %534 = vmatpush.msra.mxu0 %v509
    %535 = vmatpush.msra.mxu0 %v508
    %536 = vmatpush.msra.mxu0 %v507
    %537 = vmatpush.msra.mxu0 %v506
    %538 = vmatpush.msra.mxu0 %v505
    %539 = vmatmul.f32.gmra.mxu0 %v503
    %v540 = vpop.f32.mrf.mxu0
    %v541 = vadd.f32 %v522, %v540
    %542 = vdwg.mxu0
    %v543 = vmax.f32 %v541, 0.0
    %v544 = vld [vmem:[#allocation2 + $0x3c8] sm:$0xff]
    %v545 = vld [vmem:[#allocation2 + $0x3d0] sm:$0xff]
    %v546 = vld [vmem:[#allocation2 + $0x3d8] sm:$0xff]
    %v547 = vld [vmem:[#allocation2 + $0x3e0] sm:$0xff]
    %v548 = vld [vmem:[#allocation2 + $0x3e8] sm:$0xff]
    %v549 = vld [vmem:[#allocation2 + $0x3f0] sm:$0xff]
    %v550 = vld [vmem:[#allocation2 + $0x3f8] sm:$0xff]
    %v551 = vld [vmem:[#allocation2 + $0x400] sm:$0xff]
    %v552 = vld [vmem:[#allocation2 + $0x408] sm:$0xff]
    %v553 = vld [vmem:[#allocation2 + $0x410] sm:$0xff]
    %v554 = vld [vmem:[#allocation2 + $0x418] sm:$0xff]
    %v555 = vld [vmem:[#allocation2 + $0x420] sm:$0xff]
    %v556 = vld [vmem:[#allocation2 + $0x428] sm:$0xff]
    %v557 = vld [vmem:[#allocation2 + $0x430] sm:$0xff]
    %v558 = vld [vmem:[#allocation2 + $0x438] sm:$0xff]
    %v559 = vld [vmem:[#allocation2 + $0x440] sm:$0xff]
    %v560 = vld [vmem:[#allocation4 + $0xe] sm:$0x1]
    %v561 = vperm.slane %v560, 0
    %562 = vmatpush.msra.mxu0 %v559
    %563 = vmatpush.msra.mxu0 %v558
    %564 = vmatpush.msra.mxu0 %v557
    %565 = vmatpush.msra.mxu0 %v556
    %566 = vmatpush.msra.mxu0 %v555
    %567 = vmatpush.msra.mxu0 %v554
    %568 = vmatpush.msra.mxu0 %v553
    %569 = vmatpush.msra.mxu0 %v552
    %570 = vmatpush.msra.mxu0 %v551
    %571 = vmatpush.msra.mxu0 %v550
    %572 = vmatpush.msra.mxu0 %v549
    %573 = vmatpush.msra.mxu0 %v548
    %574 = vmatpush.msra.mxu0 %v547
    %575 = vmatpush.msra.mxu0 %v546
    %576 = vmatpush.msra.mxu0 %v545
    %577 = vmatpush.msra.mxu0 %v544
    %578 = vmatmul.f32.gmra.mxu0 %v503
    %v579 = vpop.f32.mrf.mxu0
    %v580 = vadd.f32 %v561, %v579
    %581 = vdwg.mxu0
    %v582 = vmax.f32 %v580, 0.0
    %v583 = vld [vmem:[#allocation2 + $0x448] sm:$0xff]
    %v584 = vld [vmem:[#allocation2 + $0x450] sm:$0xff]
    %v585 = vld [vmem:[#allocation2 + $0x458] sm:$0xff]
    %v586 = vld [vmem:[#allocation2 + $0x460] sm:$0xff]
    %v587 = vld [vmem:[#allocation2 + $0x468] sm:$0xff]
    %v588 = vld [vmem:[#allocation2 + $0x470] sm:$0xff]
    %v589 = vld [vmem:[#allocation2 + $0x478] sm:$0xff]
    %v590 = vld [vmem:[#allocation2 + $0x480] sm:$0xff]
    %v591 = vld [vmem:[#allocation2 + $0x488] sm:$0xff]
    %v592 = vld [vmem:[#allocation2 + $0x490] sm:$0xff]
    %v593 = vld [vmem:[#allocation2 + $0x498] sm:$0xff]
    %v594 = vld [vmem:[#allocation2 + $0x4a0] sm:$0xff]
    %v595 = vld [vmem:[#allocation2 + $0x4a8] sm:$0xff]
    %v596 = vld [vmem:[#allocation2 + $0x4b0] sm:$0xff]
    %v597 = vld [vmem:[#allocation2 + $0x4b8] sm:$0xff]
    %v598 = vld [vmem:[#allocation2 + $0x4c0] sm:$0xff]
    %v599 = vld [vmem:[#allocation2 + $0x4c8] sm:$0xff]
    %v600 = vld [vmem:[#allocation2 + $0x4d0] sm:$0xff]
    %v601 = vld [vmem:[#allocation2 + $0x4d8] sm:$0xff]
    %v602 = vld [vmem:[#allocation2 + $0x4e0] sm:$0xff]
    %v603 = vld [vmem:[#allocation2 + $0x4e8] sm:$0xff]
    %v604 = vld [vmem:[#allocation2 + $0x4f0] sm:$0xff]
    %v605 = vld [vmem:[#allocation2 + $0x4f8] sm:$0xff]
    %v606 = vld [vmem:[#allocation2 + $0x500] sm:$0xff]
    %v607 = vld [vmem:[#allocation2 + $0x508] sm:$0xff]
    %v608 = vld [vmem:[#allocation2 + $0x510] sm:$0xff]
    %v609 = vld [vmem:[#allocation2 + $0x518] sm:$0xff]
    %v610 = vld [vmem:[#allocation2 + $0x520] sm:$0xff]
    %v611 = vld [vmem:[#allocation2 + $0x528] sm:$0xff]
    %v612 = vld [vmem:[#allocation2 + $0x530] sm:$0xff]
    %v613 = vld [vmem:[#allocation2 + $0x538] sm:$0xff]
    %v614 = vld [vmem:[#allocation2 + $0x540] sm:$0xff]
    %v615 = vld [vmem:[#allocation4 + $0xf] sm:$0x1]
    %v616 = vperm.slane %v615, 0
    %617 = vmatpush.msra.mxu0 %v598
    %618 = vmatpush.msra.mxu0 %v597
    %619 = vmatpush.msra.mxu0 %v596
    %620 = vmatpush.msra.mxu0 %v595
    %621 = vmatpush.msra.mxu0 %v594
    %622 = vmatpush.msra.mxu0 %v593
    %623 = vmatpush.msra.mxu0 %v592
    %624 = vmatpush.msra.mxu0 %v591
    %625 = vmatpush.msra.mxu0 %v590
    %626 = vmatpush.msra.mxu0 %v589
    %627 = vmatpush.msra.mxu0 %v588
    %628 = vmatpush.msra.mxu0 %v587
    %629 = vmatpush.msra.mxu0 %v586
    %630 = vmatpush.msra.mxu0 %v585
    %631 = vmatpush.msra.mxu0 %v584
    %632 = vmatpush.msra.mxu0 %v583
    %633 = vmatmul.f32.gmra.mxu0 %v543
    %v634 = vpop.f32.mrf.mxu0
    %v635 = vadd.f32 %v616, %v634
    %636 = vdwg.mxu0
    %637 = vmatpush.msra.mxu0 %v614
    %638 = vmatpush.msra.mxu0 %v613
    %639 = vmatpush.msra.mxu0 %v612
    %640 = vmatpush.msra.mxu0 %v611
    %641 = vmatpush.msra.mxu0 %v610
    %642 = vmatpush.msra.mxu0 %v609
    %643 = vmatpush.msra.mxu0 %v608
    %644 = vmatpush.msra.mxu0 %v607
    %645 = vmatpush.msra.mxu0 %v606
    %646 = vmatpush.msra.mxu0 %v605
    %647 = vmatpush.msra.mxu0 %v604
    %648 = vmatpush.msra.mxu0 %v603
    %649 = vmatpush.msra.mxu0 %v602
    %650 = vmatpush.msra.mxu0 %v601
    %651 = vmatpush.msra.mxu0 %v600
    %652 = vmatpush.msra.mxu0 %v599
    %653 = vmatmul.f32.gmra.mxu0 %v582
    %v654 = vpop.f32.mrf.mxu0
    %v655 = vadd.f32 %v635, %v654
    %656 = vdwg.mxu0
    %657 = vst [vmem:[%s4] sm:$0x3] %v655
    // Predicated region
    $region26: #{forward.1} parent=1 // pred_check
      _
    $region27: #{forward.1} parent=1 // pred_check_branch
      %659 = sbr.rel (0) target = $region29
    $region28: #{forward.1} parent=1 // pred_region
      _
    $region29: #{forward.1} parent=1 // pred_fallthru
      _
    // Predicated region
    $region30: #{forward.1} parent=1 // pred_check
      _
    $region31: #{forward.1} parent=1 // pred_check_branch
      %661 = sbr.rel (0) target = $region33
    $region32: #{forward.1} parent=1 // pred_region
      _
    $region33: #{forward.1} parent=1 // pred_fallthru
      _
    %662 = vsyncpa [#allocation3], 1
    %663 = vsyncpa [#allocation5], 1

</llo_original>
